<compile_context>
chip_gen: v7x
topology: tpu7x:2x2x1
jax: 0.10.0
libtpu: 0.0.40
codegen_flags: <defaults>
</compile_context>

<pallas_src>
import functools

import jax
import jax.numpy as jnp
from jax.experimental import pallas as pl
from jax.experimental.pallas import tpu as pltpu

LANE = 128        # lane width (last-dim tiling unit)
ROW_ALIGN = 16    # batch-row alignment (covers bf16 (16,128) sublane packing)


def _round_up(n, m):
    return ((n + m - 1) // m) * m


# ----------------------------------------------------------------------------
# Fused MLP kernel: y = Linear_L(... ReLU(Linear_1(x)) ...)
# ----------------------------------------------------------------------------
def _mlp_kernel(*refs, n_layers):
    # refs = (x_ref, w0, b0, w1, b1, ..., w_{L-1}, b_{L-1}, o_ref)
    x_ref = refs[0]
    o_ref = refs[-1]
    wb_refs = refs[1:-1]

    y = x_ref[...]                                   # bf16 [TB, D0]
    for l in range(n_layers):
        w = wb_refs[2 * l][...]                      # bf16 [Din, Dout]
        b = wb_refs[2 * l + 1][...]                  # f32  [1,   Dout]
        # bf16 MXU inputs, f32 accumulation / bias-add.
        y = jnp.dot(y, w, preferred_element_type=jnp.float32) + b
        if l != n_layers - 1:
            y = jnp.maximum(y, 0.0)                  # ReLU on hidden layers
            y = y.astype(jnp.bfloat16)               # feed next MXU pass as bf16
    o_ref[...] = y.astype(o_ref.dtype)


# ----------------------------------------------------------------------------
# Parameter init / padding
# ----------------------------------------------------------------------------
def init_actor_params(key, observation_dim, hidden_dims, action_dim):
    """Deterministic parameter init. Weights stored [in, out], f32."""
    layer_dims = [observation_dim, *hidden_dims, action_dim]
    params = []
    for din, dout in zip(layer_dims[:-1], layer_dims[1:]):
        key, wk, bk = jax.random.split(key, 3)
        bound = 1.0 / jnp.sqrt(din)                  # nn.Linear default scale
        w = jax.random.uniform(wk, (din, dout), jnp.float32, -bound, bound)
        b = jax.random.uniform(bk, (dout,), jnp.float32, -bound, bound)
        params.append((w, b))
    return params


def _prep_params(params):
    """Pad hidden widths to 128 lanes; cast weights to bf16; biases f32.

    The input feature dim (first-layer din) and the final output dim
    (action_dim) are kept at their TRUE sizes: full-array last dims are legal
    block shapes and this avoids 4x input / 16x output HBM padding traffic.
    Hidden dims are zero-padded to 128 so intermediate MXU operands are
    lane-dense (zero pad columns stay zero through ReLU, so results match).
    """
    n = len(params)
    prepped = []
    prev_out_pad = params[0][0].shape[0]             # true observation_dim
    for l, (w, b) in enumerate(params):
        din, dout = w.shape
        dout_p = dout if l == n - 1 else _round_up(dout, LANE)
        wp = jnp.pad(w, ((0, prev_out_pad - din), (0, dout_p - dout)))
        bp = jnp.pad(b, (0, dout_p - dout)).reshape(1, dout_p)
        prepped.append((wp.astype(jnp.bfloat16), bp.astype(jnp.float32)))
        prev_out_pad = dout_p
    return prepped


# ----------------------------------------------------------------------------
# Actor forward (fused, single pallas_call)
# ----------------------------------------------------------------------------
def actor_forward(params, observations, *, batch_tile=1024, min_split_rows=512):
    """Forward pass of the Actor MLP (eval mode: dropout = identity)."""
    B, din = observations.shape
    assert din == params[0][0].shape[0]
    action_dim = params[-1][0].shape[1]
    n_layers = len(params)

    prepped = _prep_params(params)
    flat_wb = [a for wb in prepped for a in wb]

    # ---- batch tiling -------------------------------------------------------
    b_min = _round_up(max(B, 1), ROW_ALIGN)
    n_tiles = pl.cdiv(b_min, batch_tile)
    # v7x has 2 TensorCores: once the batch is big enough, force >=2 tiles
    # (even count) so the "parallel" grid axis shards across both cores.
    if n_tiles == 1 and b_min >= min_split_rows:
        n_tiles = 2
    if n_tiles > 1:
        n_tiles = _round_up(n_tiles, 2)
    # Balanced tile size (no near-empty tail tile).
    tb = _round_up(pl.cdiv(b_min, n_tiles), ROW_ALIGN)
    b_p = tb * n_tiles

    # Only batch-pad; feature dim stays at its true width.  Cast to bf16 to
    # halve the input HBM read (MXU is bf16-native on v5e/v6e/v7x).
    x_p = jnp.pad(observations, ((0, b_p - B), (0, 0))).astype(jnp.bfloat16)

    kernel = functools.partial(_mlp_kernel, n_layers=n_layers)

    if n_tiles == 1:
        # Tiny batch: whole-array VMEM operands, no grid -> no per-step
        # pipelining prologue, one straight DMA per operand.
        out_p = pl.pallas_call(
            kernel,
            out_shape=jax.ShapeDtypeStruct((b_p, action_dim), jnp.float32),
            in_specs=[pl.BlockSpec(memory_space=pltpu.MemorySpace.VMEM)]
            * (1 + len(flat_wb)),
            out_specs=pl.BlockSpec(memory_space=pltpu.MemorySpace.VMEM),
        )(x_p, *flat_wb)
    else:
        # Tile over batch; weights/biases use constant index_maps so they stay
        # VMEM-resident across the grid.  Batch axis marked "parallel" so v7x
        # shards grid steps across its two TensorCores.
        wb_specs = []
        for wp, bp in prepped:
            wb_specs.append(pl.BlockSpec(wp.shape, lambda i: (0, 0)))
            wb_specs.append(pl.BlockSpec(bp.shape, lambda i: (0, 0)))
        out_p = pl.pallas_call(
            kernel,
            out_shape=jax.ShapeDtypeStruct((b_p, action_dim), jnp.float32),
            grid=(n_tiles,),
            in_specs=[pl.BlockSpec((tb, din), lambda i: (i, 0))] + wb_specs,
            out_specs=pl.BlockSpec((tb, action_dim), lambda i: (i, 0)),
            compiler_params=pltpu.CompilerParams(
                dimension_semantics=("parallel",)),
        )(x_p, *flat_wb)

    # Only padded batch rows to drop; lane width is already the true action_dim.
    return out_p[:B]


# Pure-JAX f32 reference for correctness checking.
def actor_forward_ref(params, observations):
    x = observations
    n_layers = len(params)
    for i, (w, b) in enumerate(params):
        x = x @ w + b
        if i != n_layers - 1:
            x = jnp.maximum(x, 0.0)
    return x


if __name__ == "__main__":
    key = jax.random.PRNGKey(0)

    observation_dim = 32
    hidden_dims = [64, 64]
    action_dim = 8

    kp, kx1, kx2, kx3 = jax.random.split(key, 4)
    params = init_actor_params(kp, observation_dim, hidden_dims, action_dim)

    # bf16 MXU inputs (f32 accumulation) -> slightly looser tolerance vs f32 ref.
    TOL = dict(atol=5e-2, rtol=5e-2)

    # 1) Tiny batch -> single-block (no-grid) path.
    batch = 8
    obs_small = jax.random.normal(kx1, (batch, observation_dim), jnp.float32)
    out_small = jax.block_until_ready(actor_forward(params, obs_small))
    ref_small = actor_forward_ref(params, obs_small)
    assert out_small.shape == (batch, action_dim), out_small.shape
    assert jnp.allclose(out_small, ref_small, **TOL), \
        "small-batch mismatch vs pure-JAX reference"

    # 2) Batch-tiled path (even tile count, balanced tiles, weights resident).
    batch2 = 192
    obs_big = jax.random.normal(kx2, (batch2, observation_dim), jnp.float32)
    out_big = jax.block_until_ready(
        actor_forward(params, obs_big, batch_tile=64))
    ref_big = actor_forward_ref(params, obs_big)
    assert out_big.shape == (batch2, action_dim), out_big.shape
    assert jnp.allclose(out_big, ref_big, **TOL), \
        "batch-tiled mismatch vs pure-JAX reference"

    # 3) Moderately large batch at default tile -> forced 2-way split so the
    #    "parallel" axis can use both v7x TensorCores.
    batch3 = 640
    obs_mid = jax.random.normal(kx3, (batch3, observation_dim), jnp.float32)
    out_mid = jax.block_until_ready(actor_forward(params, obs_mid))
    ref_mid = actor_forward_ref(params, obs_mid)
    assert out_mid.shape == (batch3, action_dim), out_mid.shape
    assert jnp.allclose(out_mid, ref_mid, **TOL), \
        "forced-split mismatch vs pure-JAX reference"

    print("KERNEL_OK")
</pallas_src>

<mosaic_0001>
module attributes {stable_mosaic.version = 11 : i64} {
  func.func @_mlp_kernel(%arg0: memref<16x32xbf16, #tpu.memory_space<vmem>>, %arg1: memref<32x128xbf16, #tpu.memory_space<vmem>>, %arg2: memref<1x128xf32, #tpu.memory_space<vmem>>, %arg3: memref<128x128xbf16, #tpu.memory_space<vmem>>, %arg4: memref<1x128xf32, #tpu.memory_space<vmem>>, %arg5: memref<128x8xbf16, #tpu.memory_space<vmem>>, %arg6: memref<1x8xf32, #tpu.memory_space<vmem>>, %arg7: memref<16x8xf32, #tpu.memory_space<vmem>>) attributes {dimension_semantics = [], scalar_prefetch = 0 : i64, scratch_operands = 0 : i64, tpu.core_type = #tpu.core_type<tc>} {
    %c0 = arith.constant 0 : index
    %c0_0 = arith.constant 0 : index
    %0 = vector.load %arg0[%c0, %c0_0] : memref<16x32xbf16, #tpu.memory_space<vmem>>, vector<16x32xbf16>
    %c0_1 = arith.constant 0 : index
    %c0_2 = arith.constant 0 : index
    %1 = vector.load %arg1[%c0_1, %c0_2] : memref<32x128xbf16, #tpu.memory_space<vmem>>, vector<32x128xbf16>
    %c0_3 = arith.constant 0 : index
    %c0_4 = arith.constant 0 : index
    %2 = vector.load %arg2[%c0_3, %c0_4] : memref<1x128xf32, #tpu.memory_space<vmem>>, vector<1x128xf32>
    %cst = arith.constant dense<0.000000e+00> : vector<16x128xf32>
    %3 = tpu.matmul %0, %1, %cst {dimension_numbers = #tpu.dot_dimension_numbers<[1], [0], [0], [1], [0, 0, 1, 1], [], []>} : vector<16x32xbf16>, vector<32x128xbf16>, vector<16x128xf32> -> vector<16x128xf32>
    %4 = vector.broadcast %2 : vector<1x128xf32> to vector<16x128xf32>
    %5 = arith.addf %3, %4 : vector<16x128xf32>
    %cst_5 = arith.constant 0.000000e+00 : f32
    %6 = vector.broadcast %cst_5 : f32 to vector<16x128xf32>
    %7 = arith.maximumf %5, %6 : vector<16x128xf32>
    %8 = arith.truncf %7 : vector<16x128xf32> to vector<16x128xbf16>
    %c0_6 = arith.constant 0 : index
    %c0_7 = arith.constant 0 : index
    %9 = vector.load %arg3[%c0_6, %c0_7] : memref<128x128xbf16, #tpu.memory_space<vmem>>, vector<128x128xbf16>
    %c0_8 = arith.constant 0 : index
    %c0_9 = arith.constant 0 : index
    %10 = vector.load %arg4[%c0_8, %c0_9] : memref<1x128xf32, #tpu.memory_space<vmem>>, vector<1x128xf32>
    %cst_10 = arith.constant dense<0.000000e+00> : vector<16x128xf32>
    %11 = tpu.matmul %8, %9, %cst_10 {dimension_numbers = #tpu.dot_dimension_numbers<[1], [0], [0], [1], [0, 0, 1, 1], [], []>} : vector<16x128xbf16>, vector<128x128xbf16>, vector<16x128xf32> -> vector<16x128xf32>
    %12 = vector.broadcast %10 : vector<1x128xf32> to vector<16x128xf32>
    %13 = arith.addf %11, %12 : vector<16x128xf32>
    %cst_11 = arith.constant 0.000000e+00 : f32
    %14 = vector.broadcast %cst_11 : f32 to vector<16x128xf32>
    %15 = arith.maximumf %13, %14 : vector<16x128xf32>
    %16 = arith.truncf %15 : vector<16x128xf32> to vector<16x128xbf16>
    %c0_12 = arith.constant 0 : index
    %c0_13 = arith.constant 0 : index
    %17 = vector.load %arg5[%c0_12, %c0_13] : memref<128x8xbf16, #tpu.memory_space<vmem>>, vector<128x8xbf16>
    %c0_14 = arith.constant 0 : index
    %c0_15 = arith.constant 0 : index
    %18 = vector.load %arg6[%c0_14, %c0_15] : memref<1x8xf32, #tpu.memory_space<vmem>>, vector<1x8xf32>
    %cst_16 = arith.constant dense<0.000000e+00> : vector<16x8xf32>
    %19 = tpu.matmul %16, %17, %cst_16 {dimension_numbers = #tpu.dot_dimension_numbers<[1], [0], [0], [1], [0, 0, 1, 1], [], []>} : vector<16x128xbf16>, vector<128x8xbf16>, vector<16x8xf32> -> vector<16x8xf32>
    %20 = vector.broadcast %18 : vector<1x8xf32> to vector<16x8xf32>
    %21 = arith.addf %19, %20 : vector<16x8xf32>
    %c0_17 = arith.constant 0 : index
    %c0_18 = arith.constant 0 : index
    %22 = vector.load %arg7[%c0_17, %c0_18] : memref<16x8xf32, #tpu.memory_space<vmem>>, vector<16x8xf32>
    tpu.vector_store %arg7[%c0_17, %c0_18], %21 {strides = array<i32>} : memref<16x8xf32, #tpu.memory_space<vmem>>, vector<16x8xf32>,
    return
  }
}

</mosaic_0001>

<llo_original>
// kernel: tpu_custom_call.1
$region0: #{tpu_custom_call.1}
  #allocation0 [shape = 'u32[]', space=smem, size = 0x4, offset = 0x4, fixed_abs, tag = 'smem constant byte address 0x4 - core index']
  #allocation1 [shape = 'u32[144,128]{1,0:T(1,128)}', space=vmem, size = 0x12000, scoped, tag = 'internal scratch']
  %s0 = inlined_call_operand.vmem [shape: bf16[16,32], index: 0, kind: input, shape index: {}]
  %s1 = inlined_call_operand.hbm [shape: bf16[32,128], index: 1, kind: input, shape index: {}]
  %s2 = inlined_call_operand.vmem [shape: f32[1,128], index: 2, kind: input, shape index: {}]
  %s3 = inlined_call_operand.vmem [shape: bf16[128,128], index: 3, kind: input, shape index: {}]
  %s4 = inlined_call_operand.vmem [shape: f32[1,128], index: 4, kind: input, shape index: {}]
  %s5 = inlined_call_operand.vmem [shape: bf16[128,8], index: 5, kind: input, shape index: {}]
  %s6 = inlined_call_operand.vmem [shape: f32[1,8], index: 6, kind: input, shape index: {}]
  %s7 = inlined_call_operand.vmem [shape: f32[16,8], index: 7, kind: output, shape index: {}]
  %s8 = sld [smem:[#allocation0]]
  $region42: #{tpu_custom_call.1} parent=0
    _
  %s10 = ssub.s32 1, %s8
  %s11 = scalar_select 0, %s10, %s8
  $region1: #{tpu_custom_call.1} parent=0
    #allocation2 [shape = 'u8[8192]{0}', space=vmem, size = 0x2000, scoped, tag = 'input window, operand 1, single buffered']
    #allocation3 [shape = 's32[1]{0}', space=sflag, size = 0x4, scoped, tag = 'scoped memory for tpu_custom_call.1']
    %12 = vsyncpa [#allocation3], 0
    // Predicated region
    $region2: #{tpu_custom_call.1} parent=1 // pred_check
      _
    $region3: #{tpu_custom_call.1} parent=1 // pred_check_branch
      %14 = sbr.rel (0) target = $region5
    $region4: #{tpu_custom_call.1} parent=1 // pred_region
      _
    $region5: #{tpu_custom_call.1} parent=1 // pred_fallthru
      _
    // Predicated region
    $region6: #{tpu_custom_call.1} parent=1 // pred_check
      _
    $region7: #{tpu_custom_call.1} parent=1 // pred_check_branch
      %16 = sbr.rel (0) target = $region9
    $region8: #{tpu_custom_call.1} parent=1 // pred_region
      %s18 = ssub.s32 256, 256
      %19 = vsyncadd [#allocation3], %s18
      %s20 = sshll.u32 [#allocation2], 4
      %s21 = int_to_ptr.vmem [resolvable:$true] %s20
      %26 = dma.hbm_to_vmem [thread:$0]  %s1, 256, %s21, [#allocation3], 64, 64, 4
    $region9: #{tpu_custom_call.1} parent=1 // pred_fallthru
      _
    // Predicated region
    $region10: #{tpu_custom_call.1} parent=1 // pred_check
      _
    $region11: #{tpu_custom_call.1} parent=1 // pred_check_branch
      %28 = sbr.rel (0) target = $region13
    $region12: #{tpu_custom_call.1} parent=1 // pred_region
      _
    $region13: #{tpu_custom_call.1} parent=1 // pred_fallthru
      _
    // Predicated region
    $region14: #{tpu_custom_call.1} parent=1 // pred_check
      _
    $region15: #{tpu_custom_call.1} parent=1 // pred_check_branch
      %30 = sbr.rel (0) target = $region17
    $region16: #{tpu_custom_call.1} parent=1 // pred_region
      _
    $region17: #{tpu_custom_call.1} parent=1 // pred_fallthru
      _
    // Predicated region
    $region18: #{tpu_custom_call.1} parent=1 // pred_check
      _
    $region19: #{tpu_custom_call.1} parent=1 // pred_check_branch
      %32 = sbr.rel (0) target = $region21
    $region20: #{tpu_custom_call.1} parent=1 // pred_region
      _
    $region21: #{tpu_custom_call.1} parent=1 // pred_fallthru
      _
    // Predicated region
    $region22: #{tpu_custom_call.1} parent=1 // pred_check
      _
    $region23: #{tpu_custom_call.1} parent=1 // pred_check_branch
      %34 = sbr.rel (0) target = $region25
    $region24: #{tpu_custom_call.1} parent=1 // pred_region
      _
    $region25: #{tpu_custom_call.1} parent=1 // pred_fallthru
      _
    // Predicated region
    $region26: #{tpu_custom_call.1} parent=1 // pred_check
      _
    $region27: #{tpu_custom_call.1} parent=1 // pred_check_branch
      %36 = sbr.rel (0) target = $region29
    $region28: #{tpu_custom_call.1} parent=1 // pred_region
      _
    $region29: #{tpu_custom_call.1} parent=1 // pred_fallthru
      _
    // Predicated region
    $region30: #{tpu_custom_call.1} parent=1 // pred_check
      _
    $region31: #{tpu_custom_call.1} parent=1 // pred_check_branch
      %38 = sbr.rel (0) target = $region33
    $region32: #{tpu_custom_call.1} parent=1 // pred_region
      %39 = dma.done [#allocation3], 256
    $region33: #{tpu_custom_call.1} parent=1 // pred_fallthru
      _
    %v41 = vld [vmem:[%s0] sm:$0xf]
    %v42 = vld [vmem:[%s0 + $0x4] sm:$0xf]
    %v43 = vld [vmem:[#allocation2] sm:$0xf]
    %v44 = vld [vmem:[#allocation2 + $0x4] sm:$0xf]
    %v45 = vld [vmem:[#allocation2 + $0x8] sm:$0xf]
    %v46 = vld [vmem:[#allocation2 + $0xc] sm:$0xf]
    %v47 = vld [vmem:[%s2] sm:$0x1]
    %v49 = vlaneseq
    %v50 = vshrl.u32 %v49, 7
    %v51 = vsub.s32 0, %v50
    %v52 = vrot.slane %v47, %v51
    %v56 = vunpack.c.l.b16 %v41
    %v57 = vunpack.c.l.b16 %v42
    %v58 = vpack.c.b16 %v57, %v56
    %v63 = vunpack.c.l.b16 %v43
    %v64 = vunpack.c.l.b16 %v44
    %v65 = vunpack.c.l.b16 %v45
    %v66 = vunpack.c.l.b16 %v46
    %v67 = vpack.c.b16 %v64, %v63
    %v68 = vpack.c.b16 %v66, %v65
    %vm71 = vcmask 261120
    %v73 = vsel %vm71, %v58, 0
    %75 = vmatprep.subr.bf16.mxu0 0
    %76 = vmatpush1.bf16.msra.mxu0 %v67
    %77 = vmatprep.subr.bf16.mxu0 0
    %78 = vmatpush1.bf16.msra.mxu0 %v68
    %79 = vmatprep.subr.bf16.mxu0 0
    %80 = vmatpush1.bf16.msra.mxu0 0
    %81 = vmatprep.subr.bf16.mxu0 0
    %82 = vmatpush1.bf16.msra.mxu0 0
    %83 = vmatprep.subr.bf16.mxu0 0
    %84 = vmatpush1.bf16.msra.mxu0 0
    %85 = vmatprep.subr.bf16.mxu0 0
    %86 = vmatpush1.bf16.msra.mxu0 0
    %87 = vmatprep.subr.bf16.mxu0 0
    %88 = vmatpush1.bf16.msra.mxu0 0
    %89 = vmatprep.subr.bf16.mxu0 0
    %90 = vmatpush1.bf16.msra.mxu0 0
    %91 = vmatprep.subr.bf16.mxu0 0
    %92 = vmatpush1.bf16.msra.mxu0 0
    %93 = vmatprep.subr.bf16.mxu0 0
    %94 = vmatpush1.bf16.msra.mxu0 0
    %95 = vmatprep.subr.bf16.mxu0 0
    %96 = vmatpush1.bf16.msra.mxu0 0
    %97 = vmatprep.subr.bf16.mxu0 0
    %98 = vmatpush1.bf16.msra.mxu0 0
    %99 = vmatprep.subr.bf16.mxu0 0
    %100 = vmatpush1.bf16.msra.mxu0 0
    %101 = vmatprep.subr.bf16.mxu0 0
    %102 = vmatpush1.bf16.msra.mxu0 0
    %103 = vmatprep.subr.bf16.mxu0 0
    %104 = vmatpush1.bf16.msra.mxu0 0
    %105 = vmatprep.subr.bf16.mxu0 0
    %106 = vmatpush1.bf16.msra.mxu0 0
    %107 = vmatprep.mubr.bf16.mxu0 0
    %108 = vmatmul.mubr.bf16.gmra.mrb[0].mxu0 %v73
    %v109 = vpop.f32.mrb[0].mxu0
    %v110 = vadd.f32 %v52, %v109
    %v111 = vpop.f32.mrb[0].mxu0
    %v112 = vpop.f32.mrb[0].mxu0
    %v113 = vadd.f32 %v52, %v112
    %v114 = vpop.f32.mrb[0].mxu0
    %115 = vdwg.mxu0
    %v116 = vmax.f32 %v110, 0.0
    %v117 = vmax.f32 %v113, 0.0
    %v118 = vpack.c.bf16 %v117, %v116
    %v119 = vld [vmem:[%s3] sm:$0xf]
    %v120 = vld [vmem:[%s3 + $0x4] sm:$0xf]
    %v121 = vld [vmem:[%s3 + $0x8] sm:$0xf]
    %v122 = vld [vmem:[%s3 + $0xc] sm:$0xf]
    %v123 = vld [vmem:[%s3 + $0x10] sm:$0xf]
    %v124 = vld [vmem:[%s3 + $0x14] sm:$0xf]
    %v125 = vld [vmem:[%s3 + $0x18] sm:$0xf]
    %v126 = vld [vmem:[%s3 + $0x1c] sm:$0xf]
    %v127 = vld [vmem:[%s3 + $0x20] sm:$0xf]
    %v128 = vld [vmem:[%s3 + $0x24] sm:$0xf]
    %v129 = vld [vmem:[%s3 + $0x28] sm:$0xf]
    %v130 = vld [vmem:[%s3 + $0x2c] sm:$0xf]
    %v131 = vld [vmem:[%s3 + $0x30] sm:$0xf]
    %v132 = vld [vmem:[%s3 + $0x34] sm:$0xf]
    %v133 = vld [vmem:[%s3 + $0x38] sm:$0xf]
    %v134 = vld [vmem:[%s3 + $0x3c] sm:$0xf]
    %v135 = vld [vmem:[%s4] sm:$0x1]
    %v137 = vlaneseq
    %v138 = vshrl.u32 %v137, 7
    %v139 = vsub.s32 0, %v138
    %v140 = vrot.slane %v135, %v139
    %v158 = vunpack.c.l.b16 %v119
    %v159 = vunpack.c.l.b16 %v120
    %v160 = vunpack.c.l.b16 %v121
    %v161 = vunpack.c.l.b16 %v122
    %v162 = vunpack.c.l.b16 %v123
    %v163 = vunpack.c.l.b16 %v124
    %v164 = vunpack.c.l.b16 %v125
    %v165 = vunpack.c.l.b16 %v126
    %v166 = vunpack.c.l.b16 %v127
    %v167 = vunpack.c.l.b16 %v128
    %v168 = vunpack.c.l.b16 %v129
    %v169 = vunpack.c.l.b16 %v130
    %v170 = vunpack.c.l.b16 %v131
    %v171 = vunpack.c.l.b16 %v132
    %v172 = vunpack.c.l.b16 %v133
    %v173 = vunpack.c.l.b16 %v134
    %v174 = vpack.c.b16 %v159, %v158
    %v175 = vpack.c.b16 %v161, %v160
    %v176 = vpack.c.b16 %v163, %v162
    %v177 = vpack.c.b16 %v165, %v164
    %v178 = vpack.c.b16 %v167, %v166
    %v179 = vpack.c.b16 %v169, %v168
    %v180 = vpack.c.b16 %v171, %v170
    %v181 = vpack.c.b16 %v173, %v172
    %190 = vmatprep.subr.bf16.mxu0 0
    %191 = vmatpush1.bf16.msra.mxu0 %v174
    %192 = vmatprep.subr.bf16.mxu0 0
    %193 = vmatpush1.bf16.msra.mxu0 %v175
    %194 = vmatprep.subr.bf16.mxu0 0
    %195 = vmatpush1.bf16.msra.mxu0 %v176
    %196 = vmatprep.subr.bf16.mxu0 0
    %197 = vmatpush1.bf16.msra.mxu0 %v177
    %198 = vmatprep.subr.bf16.mxu0 0
    %199 = vmatpush1.bf16.msra.mxu0 %v178
    %200 = vmatprep.subr.bf16.mxu0 0
    %201 = vmatpush1.bf16.msra.mxu0 %v179
    %202 = vmatprep.subr.bf16.mxu0 0
    %203 = vmatpush1.bf16.msra.mxu0 %v180
    %204 = vmatprep.subr.bf16.mxu0 0
    %205 = vmatpush1.bf16.msra.mxu0 %v181
    %206 = vmatprep.subr.bf16.mxu0 0
    %207 = vmatpush1.bf16.msra.mxu0 0
    %208 = vmatprep.subr.bf16.mxu0 0
    %209 = vmatpush1.bf16.msra.mxu0 0
    %210 = vmatprep.subr.bf16.mxu0 0
    %211 = vmatpush1.bf16.msra.mxu0 0
    %212 = vmatprep.subr.bf16.mxu0 0
    %213 = vmatpush1.bf16.msra.mxu0 0
    %214 = vmatprep.subr.bf16.mxu0 0
    %215 = vmatpush1.bf16.msra.mxu0 0
    %216 = vmatprep.subr.bf16.mxu0 0
    %217 = vmatpush1.bf16.msra.mxu0 0
    %218 = vmatprep.subr.bf16.mxu0 0
    %219 = vmatpush1.bf16.msra.mxu0 0
    %220 = vmatprep.subr.bf16.mxu0 0
    %221 = vmatpush1.bf16.msra.mxu0 0
    %222 = vmatprep.mubr.bf16.mxu0 0
    %223 = vmatmul.mubr.bf16.gmra.mrb[0].mxu0 %v118
    %v224 = vpop.f32.mrb[0].mxu0
    %v225 = vadd.f32 %v140, %v224
    %v226 = vpop.f32.mrb[0].mxu0
    %v227 = vpop.f32.mrb[0].mxu0
    %v228 = vadd.f32 %v140, %v227
    %v229 = vpop.f32.mrb[0].mxu0
    %230 = vdwg.mxu0
    %v231 = vmax.f32 %v225, 0.0
    %v232 = vmax.f32 %v228, 0.0
    %v233 = vpack.c.bf16 %v232, %v231
    %v234 = vld [vmem:[%s5] sm:$0xf]
    %v235 = vld [vmem:[%s5 + $0x4] sm:$0xf]
    %v236 = vld [vmem:[%s5 + $0x8] sm:$0xf]
    %v237 = vld [vmem:[%s5 + $0xc] sm:$0xf]
    %v238 = vld [vmem:[%s5 + $0x10] sm:$0xf]
    %v239 = vld [vmem:[%s5 + $0x14] sm:$0xf]
    %v240 = vld [vmem:[%s5 + $0x18] sm:$0xf]
    %v241 = vld [vmem:[%s5 + $0x1c] sm:$0xf]
    %v242 = vld [vmem:[%s5 + $0x20] sm:$0xf]
    %v243 = vld [vmem:[%s5 + $0x24] sm:$0xf]
    %v244 = vld [vmem:[%s5 + $0x28] sm:$0xf]
    %v245 = vld [vmem:[%s5 + $0x2c] sm:$0xf]
    %v246 = vld [vmem:[%s5 + $0x30] sm:$0xf]
    %v247 = vld [vmem:[%s5 + $0x34] sm:$0xf]
    %v248 = vld [vmem:[%s5 + $0x38] sm:$0xf]
    %v249 = vld [vmem:[%s5 + $0x3c] sm:$0xf]
    %v250 = vld [vmem:[%s6] sm:$0x1]
    %v252 = vlaneseq
    %v253 = vshrl.u32 %v252, 7
    %v254 = vsub.s32 0, %v253
    %v255 = vrot.slane %v250, %v254
    %v273 = vunpack.c.l.b16 %v234
    %v274 = vunpack.c.l.b16 %v235
    %v275 = vunpack.c.l.b16 %v236
    %v276 = vunpack.c.l.b16 %v237
    %v277 = vunpack.c.l.b16 %v238
    %v278 = vunpack.c.l.b16 %v239
    %v279 = vunpack.c.l.b16 %v240
    %v280 = vunpack.c.l.b16 %v241
    %v281 = vunpack.c.l.b16 %v242
    %v282 = vunpack.c.l.b16 %v243
    %v283 = vunpack.c.l.b16 %v244
    %v284 = vunpack.c.l.b16 %v245
    %v285 = vunpack.c.l.b16 %v246
    %v286 = vunpack.c.l.b16 %v247
    %v287 = vunpack.c.l.b16 %v248
    %v288 = vunpack.c.l.b16 %v249
    %v289 = vpack.c.b16 %v274, %v273
    %v290 = vpack.c.b16 %v276, %v275
    %v291 = vpack.c.b16 %v278, %v277
    %v292 = vpack.c.b16 %v280, %v279
    %v293 = vpack.c.b16 %v282, %v281
    %v294 = vpack.c.b16 %v284, %v283
    %v295 = vpack.c.b16 %v286, %v285
    %v296 = vpack.c.b16 %v288, %v287
    %305 = vmatprep.subr.bf16.mxu0 0
    %306 = vmatpush1.bf16.msra.mxu0 %v289
    %307 = vmatprep.subr.bf16.mxu0 0
    %308 = vmatpush1.bf16.msra.mxu0 %v290
    %309 = vmatprep.subr.bf16.mxu0 0
    %310 = vmatpush1.bf16.msra.mxu0 %v291
    %311 = vmatprep.subr.bf16.mxu0 0
    %312 = vmatpush1.bf16.msra.mxu0 %v292
    %313 = vmatprep.subr.bf16.mxu0 0
    %314 = vmatpush1.bf16.msra.mxu0 %v293
    %315 = vmatprep.subr.bf16.mxu0 0
    %316 = vmatpush1.bf16.msra.mxu0 %v294
    %317 = vmatprep.subr.bf16.mxu0 0
    %318 = vmatpush1.bf16.msra.mxu0 %v295
    %319 = vmatprep.subr.bf16.mxu0 0
    %320 = vmatpush1.bf16.msra.mxu0 %v296
    %321 = vmatprep.subr.bf16.mxu0 0
    %322 = vmatpush1.bf16.msra.mxu0 0
    %323 = vmatprep.subr.bf16.mxu0 0
    %324 = vmatpush1.bf16.msra.mxu0 0
    %325 = vmatprep.subr.bf16.mxu0 0
    %326 = vmatpush1.bf16.msra.mxu0 0
    %327 = vmatprep.subr.bf16.mxu0 0
    %328 = vmatpush1.bf16.msra.mxu0 0
    %329 = vmatprep.subr.bf16.mxu0 0
    %330 = vmatpush1.bf16.msra.mxu0 0
    %331 = vmatprep.subr.bf16.mxu0 0
    %332 = vmatpush1.bf16.msra.mxu0 0
    %333 = vmatprep.subr.bf16.mxu0 0
    %334 = vmatpush1.bf16.msra.mxu0 0
    %335 = vmatprep.subr.bf16.mxu0 0
    %336 = vmatpush1.bf16.msra.mxu0 0
    %337 = vmatprep.mubr.bf16.mxu0 0
    %338 = vmatmul.mubr.bf16.gmra.mrb[0].mxu0 %v233
    %v339 = vpop.f32.mrb[0].mxu0
    %v340 = vadd.f32 %v255, %v339
    %v341 = vpop.f32.mrb[0].mxu0
    %v342 = vpop.f32.mrb[0].mxu0
    %v343 = vadd.f32 %v255, %v342
    %v344 = vpop.f32.mrb[0].mxu0
    %345 = vdwg.mxu0
    %vm346 = vcmask 64512
    %347 = vst.msk [vmem:[%s7] sm:$0xff] %vm346, %v340
    %348 = vst.msk [vmem:[%s7 + $0x8] sm:$0xff] %vm346, %v343
    // Predicated region
    $region34: #{tpu_custom_call.1} parent=1 // pred_check
      _
    $region35: #{tpu_custom_call.1} parent=1 // pred_check_branch
      %350 = sbr.rel (0) target = $region37
    $region36: #{tpu_custom_call.1} parent=1 // pred_region
      _
    $region37: #{tpu_custom_call.1} parent=1 // pred_fallthru
      _
    // Predicated region
    $region38: #{tpu_custom_call.1} parent=1 // pred_check
      _
    $region39: #{tpu_custom_call.1} parent=1 // pred_check_branch
      %352 = sbr.rel (0) target = $region41
    $region40: #{tpu_custom_call.1} parent=1 // pred_region
      _
    $region41: #{tpu_custom_call.1} parent=1 // pred_fallthru
      _
    %353 = vsyncpa [#allocation3], 1

</llo_original>
